<compile_context>
chip_gen: v6e
topology: v6e:2x2x1
jax: 0.10.0
libtpu: 0.0.40
codegen_flags: <defaults>
</compile_context>

<pallas_src>
import math

import jax
import jax.numpy as jnp
from jax.experimental import pallas as pl
from jax.experimental.pallas import tpu as pltpu


def _round_up(x, m):
    return ((x + m - 1) // m) * m


# --------------------------------------------------------------------------
# Pallas kernel: full MLP hot path on one batch tile.
# --------------------------------------------------------------------------
def _mlp_kernel(xt_ref, w1_ref, b1_ref, w2_ref, b2_ref, w3_ref, b3_ref, out_ref):
    # net1: (tb, data+time) @ (data+time, H) + b1   (bf16 MXU, f32 accumulate)
    h = jnp.dot(xt_ref[...].astype(w1_ref.dtype), w1_ref[...],
                preferred_element_type=jnp.float32) + b1_ref[...]

    # net2: 3 x (Linear + ReLU).  bf16 matmul operands, f32 bias add + ReLU.
    for l in range(3):
        h = jnp.dot(h.astype(w2_ref.dtype), w2_ref[l],
                    preferred_element_type=jnp.float32) + b2_ref[l]
        h = jnp.maximum(h, 0.0)

    # net3: lane-dense (128-wide, zero-padded) output -> unmasked full-lane store.
    out = jnp.dot(h.astype(w3_ref.dtype), w3_ref[...],
                  preferred_element_type=jnp.float32) + b3_ref[...]
    out_ref[...] = out.astype(out_ref.dtype)


# --------------------------------------------------------------------------
# Wrapper: time features + hstack (tiny, wrapper-side), then the kernel.
# --------------------------------------------------------------------------
def boosting_time_emb_forward(x, time, prepared, *, tile_b=None):
    """x: (B, data_dim) f32, time: (B, 1) int. Returns (B, data_dim) f32."""
    w1, b1, div_term, w2s, b2s, w3p, b3p = prepared
    B, data_dim = x.shape
    in_dim = w1.shape[0]
    outp = w3p.shape[1]

    # Fairseq sinusoidal PE evaluated at t:  pe[t] = [sin(t*div), cos(t*div)]
    # (bit-identical math to the table lookup for integer t).
    t = jnp.reshape(time, (-1, 1)).astype(jnp.int32).astype(jnp.float32)
    t_div = t * div_term[None, :]                                   # (B, time_dim/2)
    xt = jnp.concatenate([x, jnp.sin(t_div), jnp.cos(t_div)], axis=1)  # hstack

    tb = tile_b or min(512, _round_up(B, 8))                # batch tile (mult of 8)
    b_pad = _round_up(B, tb)
    if b_pad != B:
        xt = jnp.pad(xt, ((0, b_pad - B), (0, 0)))

    in_specs = [
        pl.BlockSpec((tb, in_dim), lambda i: (i, 0)),       # [x, t_emb], batch-tiled
        # Weights / biases: constant index_map -> DMA'd once, VMEM-resident.
        pl.BlockSpec(w1.shape, lambda i: (0, 0)),
        pl.BlockSpec(b1.shape, lambda i: (0, 0)),
        pl.BlockSpec(w2s.shape, lambda i: (0, 0, 0)),
        pl.BlockSpec(b2s.shape, lambda i: (0, 0, 0)),
        pl.BlockSpec(w3p.shape, lambda i: (0, 0)),
        pl.BlockSpec(b3p.shape, lambda i: (0, 0)),
    ]
    out_specs = pl.BlockSpec((tb, outp), lambda i: (i, 0))  # lane-dense output

    out = pl.pallas_call(
        _mlp_kernel,
        out_shape=jax.ShapeDtypeStruct((b_pad, outp), jnp.float32),
        grid=(b_pad // tb,),
        in_specs=in_specs,
        out_specs=out_specs,
        compiler_params=pltpu.CompilerParams(
            dimension_semantics=("parallel",)),
    )(xt, w1, b1, w2s, b2s, w3p, b3p)

    return out[:B, :data_dim]


# --------------------------------------------------------------------------
# Parameter init (deterministic, PyTorch Linear-style uniform) + kernel prep.
# --------------------------------------------------------------------------
def _init_linear(key, fan_in, fan_out):
    kw, kb = jax.random.split(key)
    bound = 1.0 / math.sqrt(fan_in)
    w = jax.random.uniform(kw, (fan_in, fan_out), jnp.float32, -bound, bound)  # (in, out)
    b = jax.random.uniform(kb, (1, fan_out), jnp.float32, -bound, bound)
    return w, b


def init_params(key, data_dim, time_dim, hidden_dim):
    keys = jax.random.split(key, 5)
    w1, b1 = _init_linear(keys[0], data_dim + time_dim, hidden_dim)
    w2a, b2a = _init_linear(keys[1], hidden_dim, hidden_dim)
    w2b, b2b = _init_linear(keys[2], hidden_dim, hidden_dim)
    w2c, b2c = _init_linear(keys[3], hidden_dim, hidden_dim)
    w3, b3 = _init_linear(keys[4], hidden_dim, data_dim)
    return (w1, b1, w2a, b2a, w2b, b2b, w2c, b2c, w3, b3)


def prepare_params(params, data_dim, time_dim, max_period=10000.0):
    """Offline prep: bf16 matmul weights, stacked hidden layers, lane-dense
    (128-padded) last layer, PE frequency vector."""
    (w1, b1, w2a, b2a, w2b, b2b, w2c, b2c, w3, b3) = params
    hidden = w1.shape[1]

    emb_half = time_dim // 2
    scale = math.log(max_period) / (emb_half - 1)
    div_term = jnp.exp(-scale * jnp.arange(emb_half, dtype=jnp.float32))   # (time_dim/2,)

    w1b = w1.astype(jnp.bfloat16)                                    # (data+time, H)
    w2s = jnp.stack([w2a, w2b, w2c], axis=0).astype(jnp.bfloat16)    # (3, H, H)
    b2s = jnp.stack([b2a, b2b, b2c], axis=0)                         # (3, 1, H) f32

    outp = _round_up(max(data_dim, 128), 128)
    w3p = jnp.zeros((hidden, outp), jnp.float32).at[:, :data_dim].set(w3)
    w3p = w3p.astype(jnp.bfloat16)
    b3p = jnp.zeros((1, outp), jnp.float32).at[:, :data_dim].set(b3)
    return (w1b, b1, div_term, w2s, b2s, w3p, b3p)


# --------------------------------------------------------------------------
# Pure-JAX reference doing the same (bf16-weight, f32-accumulate) math.
# --------------------------------------------------------------------------
def _reference_forward(x, time, prepared):
    w1, b1, div_term, w2s, b2s, w3p, b3p = prepared
    data_dim = x.shape[1]
    t = jnp.reshape(time, (-1, 1)).astype(jnp.int32).astype(jnp.float32)
    t_div = t * div_term[None, :]
    xt = jnp.concatenate([x, jnp.sin(t_div), jnp.cos(t_div)], axis=1)
    h = jnp.dot(xt.astype(jnp.bfloat16), w1, preferred_element_type=jnp.float32) + b1
    for l in range(3):
        h = jnp.dot(h.astype(jnp.bfloat16), w2s[l],
                    preferred_element_type=jnp.float32) + b2s[l]
        h = jnp.maximum(h, 0.0)
    out = jnp.dot(h.astype(jnp.bfloat16), w3p,
                  preferred_element_type=jnp.float32) + b3p
    return out[:, :data_dim]


if __name__ == "__main__":
    # Small shapes consistent with the module.
    batch = 8
    data_dim = 4
    time_dim = 8           # must be even and > 2 for the Fairseq PE formula
    hidden_dim = 128
    total_timesteps = 1000

    key = jax.random.PRNGKey(0)
    k_x, k_t, k_p = jax.random.split(key, 3)

    x = jax.random.normal(k_x, (batch, data_dim), jnp.float32)
    time = jax.random.randint(k_t, (batch, 1), 0, total_timesteps).astype(jnp.int32)

    params = init_params(k_p, data_dim, time_dim, hidden_dim)
    prepared = prepare_params(params, data_dim, time_dim)

    fwd = jax.jit(boosting_time_emb_forward)
    out = jax.block_until_ready(fwd(x, time, prepared))

    ref = _reference_forward(x, time, prepared)
    assert out.shape == (batch, data_dim)
    assert jnp.allclose(out, ref, atol=1e-3, rtol=1e-3), "mismatch vs reference"

    print("KERNEL_OK")
</pallas_src>

<mosaic_0001>
module attributes {stable_mosaic.version = 11 : i64} {
  func.func @_mlp_kernel(%arg0: i32, %arg1: memref<8x12xf32, #tpu.memory_space<vmem>>, %arg2: memref<12x128xbf16, #tpu.memory_space<vmem>>, %arg3: memref<1x128xf32, #tpu.memory_space<vmem>>, %arg4: memref<3x128x128xbf16, #tpu.memory_space<vmem>>, %arg5: memref<3x1x128xf32, #tpu.memory_space<vmem>>, %arg6: memref<128x128xbf16, #tpu.memory_space<vmem>>, %arg7: memref<1x128xf32, #tpu.memory_space<vmem>>, %arg8: memref<8x128xf32, #tpu.memory_space<vmem>>) attributes {dimension_semantics = [#tpu.dimension_semantics<parallel>], iteration_bounds = array<i64: 1>, scalar_prefetch = 0 : i64, scratch_operands = 0 : i64, tpu.core_type = #tpu.core_type<tc>, window_params = [{transform_indices = @transform_0, window_bounds = array<i64: 8, 12>}, {pipeline_mode = #tpu.pipeline_mode<synchronous>, transform_indices = @transform_1, window_bounds = array<i64: 12, 128>}, {pipeline_mode = #tpu.pipeline_mode<synchronous>, transform_indices = @transform_2, window_bounds = array<i64: 1, 128>}, {pipeline_mode = #tpu.pipeline_mode<synchronous>, transform_indices = @transform_3, window_bounds = array<i64: 3, 128, 128>}, {pipeline_mode = #tpu.pipeline_mode<synchronous>, transform_indices = @transform_4, window_bounds = array<i64: 3, 1, 128>}, {pipeline_mode = #tpu.pipeline_mode<synchronous>, transform_indices = @transform_5, window_bounds = array<i64: 128, 128>}, {pipeline_mode = #tpu.pipeline_mode<synchronous>, transform_indices = @transform_6, window_bounds = array<i64: 1, 128>}, {transform_indices = @transform_7, window_bounds = array<i64: 8, 128>}]} {
    %c0 = arith.constant 0 : index
    %c0_0 = arith.constant 0 : index
    %0 = vector.load %arg1[%c0, %c0_0] : memref<8x12xf32, #tpu.memory_space<vmem>>, vector<8x12xf32>
    %1 = arith.truncf %0 : vector<8x12xf32> to vector<8x12xbf16>
    %c0_1 = arith.constant 0 : index
    %c0_2 = arith.constant 0 : index
    %2 = vector.load %arg2[%c0_1, %c0_2] : memref<12x128xbf16, #tpu.memory_space<vmem>>, vector<12x128xbf16>
    %cst = arith.constant dense<0.000000e+00> : vector<8x128xf32>
    %3 = tpu.matmul %1, %2, %cst {dimension_numbers = #tpu.dot_dimension_numbers<[1], [0], [0], [1], [0, 0, 1, 1], [], []>} : vector<8x12xbf16>, vector<12x128xbf16>, vector<8x128xf32> -> vector<8x128xf32>
    %c0_3 = arith.constant 0 : index
    %c0_4 = arith.constant 0 : index
    %4 = vector.load %arg3[%c0_3, %c0_4] : memref<1x128xf32, #tpu.memory_space<vmem>>, vector<1x128xf32>
    %5 = vector.broadcast %4 : vector<1x128xf32> to vector<8x128xf32>
    %6 = arith.addf %3, %5 : vector<8x128xf32>
    %7 = arith.truncf %6 : vector<8x128xf32> to vector<8x128xbf16>
    %c0_5 = arith.constant 0 : index
    %c0_6 = arith.constant 0 : index
    %c0_7 = arith.constant 0 : index
    %8 = vector.load %arg4[%c0_5, %c0_6, %c0_7] : memref<3x128x128xbf16, #tpu.memory_space<vmem>>, vector<1x128x128xbf16>
    %9 = vector.shape_cast %8 : vector<1x128x128xbf16> to vector<128x128xbf16>
    %cst_8 = arith.constant dense<0.000000e+00> : vector<8x128xf32>
    %10 = tpu.matmul %7, %9, %cst_8 {dimension_numbers = #tpu.dot_dimension_numbers<[1], [0], [0], [1], [0, 0, 1, 1], [], []>} : vector<8x128xbf16>, vector<128x128xbf16>, vector<8x128xf32> -> vector<8x128xf32>
    %c0_9 = arith.constant 0 : index
    %c0_10 = arith.constant 0 : index
    %c0_11 = arith.constant 0 : index
    %11 = vector.load %arg5[%c0_9, %c0_10, %c0_11] : memref<3x1x128xf32, #tpu.memory_space<vmem>>, vector<1x1x128xf32>
    %12 = vector.shape_cast %11 : vector<1x1x128xf32> to vector<1x128xf32>
    %13 = vector.broadcast %12 : vector<1x128xf32> to vector<8x128xf32>
    %14 = arith.addf %10, %13 : vector<8x128xf32>
    %cst_12 = arith.constant 0.000000e+00 : f32
    %15 = vector.broadcast %cst_12 : f32 to vector<8x128xf32>
    %16 = arith.maximumf %14, %15 : vector<8x128xf32>
    %17 = arith.truncf %16 : vector<8x128xf32> to vector<8x128xbf16>
    %c1 = arith.constant 1 : index
    %c0_13 = arith.constant 0 : index
    %c0_14 = arith.constant 0 : index
    %18 = vector.load %arg4[%c1, %c0_13, %c0_14] : memref<3x128x128xbf16, #tpu.memory_space<vmem>>, vector<1x128x128xbf16>
    %19 = vector.shape_cast %18 : vector<1x128x128xbf16> to vector<128x128xbf16>
    %cst_15 = arith.constant dense<0.000000e+00> : vector<8x128xf32>
    %20 = tpu.matmul %17, %19, %cst_15 {dimension_numbers = #tpu.dot_dimension_numbers<[1], [0], [0], [1], [0, 0, 1, 1], [], []>} : vector<8x128xbf16>, vector<128x128xbf16>, vector<8x128xf32> -> vector<8x128xf32>
    %c1_16 = arith.constant 1 : index
    %c0_17 = arith.constant 0 : index
    %c0_18 = arith.constant 0 : index
    %21 = vector.load %arg5[%c1_16, %c0_17, %c0_18] : memref<3x1x128xf32, #tpu.memory_space<vmem>>, vector<1x1x128xf32>
    %22 = vector.shape_cast %21 : vector<1x1x128xf32> to vector<1x128xf32>
    %23 = vector.broadcast %22 : vector<1x128xf32> to vector<8x128xf32>
    %24 = arith.addf %20, %23 : vector<8x128xf32>
    %cst_19 = arith.constant 0.000000e+00 : f32
    %25 = vector.broadcast %cst_19 : f32 to vector<8x128xf32>
    %26 = arith.maximumf %24, %25 : vector<8x128xf32>
    %27 = arith.truncf %26 : vector<8x128xf32> to vector<8x128xbf16>
    %c2 = arith.constant 2 : index
    %c0_20 = arith.constant 0 : index
    %c0_21 = arith.constant 0 : index
    %28 = vector.load %arg4[%c2, %c0_20, %c0_21] : memref<3x128x128xbf16, #tpu.memory_space<vmem>>, vector<1x128x128xbf16>
    %29 = vector.shape_cast %28 : vector<1x128x128xbf16> to vector<128x128xbf16>
    %cst_22 = arith.constant dense<0.000000e+00> : vector<8x128xf32>
    %30 = tpu.matmul %27, %29, %cst_22 {dimension_numbers = #tpu.dot_dimension_numbers<[1], [0], [0], [1], [0, 0, 1, 1], [], []>} : vector<8x128xbf16>, vector<128x128xbf16>, vector<8x128xf32> -> vector<8x128xf32>
    %c2_23 = arith.constant 2 : index
    %c0_24 = arith.constant 0 : index
    %c0_25 = arith.constant 0 : index
    %31 = vector.load %arg5[%c2_23, %c0_24, %c0_25] : memref<3x1x128xf32, #tpu.memory_space<vmem>>, vector<1x1x128xf32>
    %32 = vector.shape_cast %31 : vector<1x1x128xf32> to vector<1x128xf32>
    %33 = vector.broadcast %32 : vector<1x128xf32> to vector<8x128xf32>
    %34 = arith.addf %30, %33 : vector<8x128xf32>
    %cst_26 = arith.constant 0.000000e+00 : f32
    %35 = vector.broadcast %cst_26 : f32 to vector<8x128xf32>
    %36 = arith.maximumf %34, %35 : vector<8x128xf32>
    %37 = arith.truncf %36 : vector<8x128xf32> to vector<8x128xbf16>
    %c0_27 = arith.constant 0 : index
    %c0_28 = arith.constant 0 : index
    %38 = vector.load %arg6[%c0_27, %c0_28] : memref<128x128xbf16, #tpu.memory_space<vmem>>, vector<128x128xbf16>
    %cst_29 = arith.constant dense<0.000000e+00> : vector<8x128xf32>
    %39 = tpu.matmul %37, %38, %cst_29 {dimension_numbers = #tpu.dot_dimension_numbers<[1], [0], [0], [1], [0, 0, 1, 1], [], []>} : vector<8x128xbf16>, vector<128x128xbf16>, vector<8x128xf32> -> vector<8x128xf32>
    %c0_30 = arith.constant 0 : index
    %c0_31 = arith.constant 0 : index
    %40 = vector.load %arg7[%c0_30, %c0_31] : memref<1x128xf32, #tpu.memory_space<vmem>>, vector<1x128xf32>
    %41 = vector.broadcast %40 : vector<1x128xf32> to vector<8x128xf32>
    %42 = arith.addf %39, %41 : vector<8x128xf32>
    %c0_32 = arith.constant 0 : index
    %c0_33 = arith.constant 0 : index
    %43 = vector.load %arg8[%c0_32, %c0_33] : memref<8x128xf32, #tpu.memory_space<vmem>>, vector<8x128xf32>
    tpu.vector_store %arg8[%c0_32, %c0_33], %42 {strides = array<i32>} : memref<8x128xf32, #tpu.memory_space<vmem>>, vector<8x128xf32>,
    return
  }
  func.func @transform_0(%arg0: i32) -> (i32, i32) {
    %c0_i32 = arith.constant 0 : i32
    %c0_i32_0 = arith.constant 0 : i32
    return %arg0, %c0_i32 : i32, i32
  }
  func.func @transform_1(%arg0: i32) -> (i32, i32) {
    %c0_i32 = arith.constant 0 : i32
    %c0_i32_0 = arith.constant 0 : i32
    %c0_i32_1 = arith.constant 0 : i32
    return %c0_i32, %c0_i32_0 : i32, i32
  }
  func.func @transform_2(%arg0: i32) -> (i32, i32) {
    %c0_i32 = arith.constant 0 : i32
    %c0_i32_0 = arith.constant 0 : i32
    %c0_i32_1 = arith.constant 0 : i32
    return %c0_i32, %c0_i32_0 : i32, i32
  }
  func.func @transform_3(%arg0: i32) -> (i32, i32, i32) {
    %c0_i32 = arith.constant 0 : i32
    %c0_i32_0 = arith.constant 0 : i32
    %c0_i32_1 = arith.constant 0 : i32
    %c0_i32_2 = arith.constant 0 : i32
    return %c0_i32, %c0_i32_0, %c0_i32_1 : i32, i32, i32
  }
  func.func @transform_4(%arg0: i32) -> (i32, i32, i32) {
    %c0_i32 = arith.constant 0 : i32
    %c0_i32_0 = arith.constant 0 : i32
    %c0_i32_1 = arith.constant 0 : i32
    %c0_i32_2 = arith.constant 0 : i32
    return %c0_i32, %c0_i32_0, %c0_i32_1 : i32, i32, i32
  }
  func.func @transform_5(%arg0: i32) -> (i32, i32) {
    %c0_i32 = arith.constant 0 : i32
    %c0_i32_0 = arith.constant 0 : i32
    %c0_i32_1 = arith.constant 0 : i32
    return %c0_i32, %c0_i32_0 : i32, i32
  }
  func.func @transform_6(%arg0: i32) -> (i32, i32) {
    %c0_i32 = arith.constant 0 : i32
    %c0_i32_0 = arith.constant 0 : i32
    %c0_i32_1 = arith.constant 0 : i32
    return %c0_i32, %c0_i32_0 : i32, i32
  }
  func.func @transform_7(%arg0: i32) -> (i32, i32) {
    %c0_i32 = arith.constant 0 : i32
    %c0_i32_0 = arith.constant 0 : i32
    return %arg0, %c0_i32 : i32, i32
  }
}

</mosaic_0001>

<llo_original>
// kernel: boosting_time_emb_forward.1
$region0: #{boosting_time_emb_forward.1}
  #allocation0 [shape = 'u32[]', space=smem, size = 0x4, offset = 0x4, fixed_abs, tag = 'smem constant byte address 0x4 - core index']
  #allocation1 [shape = 'u32[144,128]{1,0:T(1,128)}', space=vmem, size = 0x12000, scoped, tag = 'internal scratch']
  %s0 = inlined_call_operand.vmem [shape: f32[8,12], index: 0, kind: input, shape index: {}]
  %s1 = inlined_call_operand.vmem [shape: bf16[12,128], index: 1, kind: input, shape index: {}]
  %s2 = inlined_call_operand.vmem [shape: f32[1,128], index: 2, kind: input, shape index: {}]
  %s3 = inlined_call_operand.hbm [shape: bf16[3,128,128], index: 3, kind: input, shape index: {}]
  %s4 = inlined_call_operand.vmem [shape: f32[3,1,128], index: 4, kind: input, shape index: {}]
  %s5 = inlined_call_operand.vmem [shape: bf16[128,128], index: 5, kind: input, shape index: {}]
  %s6 = inlined_call_operand.vmem [shape: f32[1,128], index: 6, kind: input, shape index: {}]
  %s7 = inlined_call_operand.vmem [shape: f32[8,128], index: 7, kind: output, shape index: {}]
  %s8 = sld [smem:[#allocation0]]
  $region42: #{boosting_time_emb_forward.1} parent=0
    _
  %s10 = ssub.s32 1, %s8
  %s11 = scalar_select 0, %s10, %s8
  $region1: #{boosting_time_emb_forward.1} parent=0
    #allocation2 [shape = 'u8[98304]{0}', space=vmem, size = 0x18000, scoped, tag = 'input window, operand 3, single buffered']
    #allocation3 [shape = 's32[1]{0}', space=sflag, size = 0x4, scoped, tag = 'scoped memory for boosting_time_emb_forward.1']
    %12 = vsyncpa [#allocation3], 0
    // Predicated region
    $region2: #{boosting_time_emb_forward.1} parent=1 // pred_check
      _
    $region3: #{boosting_time_emb_forward.1} parent=1 // pred_check_branch
      %14 = sbr.rel (0) target = $region5
    $region4: #{boosting_time_emb_forward.1} parent=1 // pred_region
      _
    $region5: #{boosting_time_emb_forward.1} parent=1 // pred_fallthru
      _
    // Predicated region
    $region6: #{boosting_time_emb_forward.1} parent=1 // pred_check
      _
    $region7: #{boosting_time_emb_forward.1} parent=1 // pred_check_branch
      %16 = sbr.rel (0) target = $region9
    $region8: #{boosting_time_emb_forward.1} parent=1 // pred_region
      _
    $region9: #{boosting_time_emb_forward.1} parent=1 // pred_fallthru
      _
    // Predicated region
    $region10: #{boosting_time_emb_forward.1} parent=1 // pred_check
      _
    $region11: #{boosting_time_emb_forward.1} parent=1 // pred_check_branch
      %18 = sbr.rel (0) target = $region13
    $region12: #{boosting_time_emb_forward.1} parent=1 // pred_region
      _
    $region13: #{boosting_time_emb_forward.1} parent=1 // pred_fallthru
      _
    // Predicated region
    $region14: #{boosting_time_emb_forward.1} parent=1 // pred_check
      _
    $region15: #{boosting_time_emb_forward.1} parent=1 // pred_check_branch
      %20 = sbr.rel (0) target = $region17
    $region16: #{boosting_time_emb_forward.1} parent=1 // pred_region
      %s22 = ssub.s32 3072, 3072
      %23 = vsyncadd [#allocation3], %s22
      %s24 = sshll.u32 [#allocation2], 4
      %s25 = int_to_ptr.vmem [resolvable:$true] %s24
      %30 = dma.hbm_to_vmem [thread:$0]  %s3, 3072, %s25, [#allocation3], 64, 64, 4
    $region17: #{boosting_time_emb_forward.1} parent=1 // pred_fallthru
      _
    // Predicated region
    $region18: #{boosting_time_emb_forward.1} parent=1 // pred_check
      _
    $region19: #{boosting_time_emb_forward.1} parent=1 // pred_check_branch
      %32 = sbr.rel (0) target = $region21
    $region20: #{boosting_time_emb_forward.1} parent=1 // pred_region
      _
    $region21: #{boosting_time_emb_forward.1} parent=1 // pred_fallthru
      _
    // Predicated region
    $region22: #{boosting_time_emb_forward.1} parent=1 // pred_check
      _
    $region23: #{boosting_time_emb_forward.1} parent=1 // pred_check_branch
      %34 = sbr.rel (0) target = $region25
    $region24: #{boosting_time_emb_forward.1} parent=1 // pred_region
      _
    $region25: #{boosting_time_emb_forward.1} parent=1 // pred_fallthru
      _
    // Predicated region
    $region26: #{boosting_time_emb_forward.1} parent=1 // pred_check
      _
    $region27: #{boosting_time_emb_forward.1} parent=1 // pred_check_branch
      %36 = sbr.rel (0) target = $region29
    $region28: #{boosting_time_emb_forward.1} parent=1 // pred_region
      _
    $region29: #{boosting_time_emb_forward.1} parent=1 // pred_fallthru
      _
    // Predicated region
    $region30: #{boosting_time_emb_forward.1} parent=1 // pred_check
      _
    $region31: #{boosting_time_emb_forward.1} parent=1 // pred_check_branch
      %38 = sbr.rel (0) target = $region33
    $region32: #{boosting_time_emb_forward.1} parent=1 // pred_region
      %39 = dma.done [#allocation3], 3072
    $region33: #{boosting_time_emb_forward.1} parent=1 // pred_fallthru
      _
    %v41 = vld [vmem:[%s0] sm:$0xff]
    %v42 = vpack.c.bf16 %v41, %v41
    %v43 = vld [vmem:[%s1] sm:$0xf]
    %v44 = vld [vmem:[%s1 + $0x4] sm:$0x3]
    %v45 = vld [vmem:[%s2] sm:$0x1]
    %v47 = vlaneseq
    %v48 = vshrl.u32 %v47, 7
    %v49 = vsub.s32 0, %v48
    %v50 = vrot.slane %v45, %v49
    %v54 = vunpack.c.l.b16 %v43
    %v55 = vunpack.c.l.b16 %v44
    %v56 = vpack.c.b16 %v55, %v54
    %vm57 = vcmask 97280
    %v59 = vsel %vm57, %v42, 0
    %vm61 = vcmask 1045504
    %v63 = vsel %vm61, %v56, 0
    %65 = vmatprep.subr.bf16.mxu0 0
    %66 = vmatpush1.bf16.msra.mxu0 0
    %67 = vmatprep.subr.bf16.mxu0 0
    %68 = vmatpush1.bf16.msra.mxu0 0
    %69 = vmatprep.subr.bf16.mxu0 0
    %70 = vmatpush1.bf16.msra.mxu0 0
    %71 = vmatprep.subr.bf16.mxu0 0
    %72 = vmatpush1.bf16.msra.mxu0 0
    %73 = vmatprep.subr.bf16.mxu0 0
    %74 = vmatpush1.bf16.msra.mxu0 0
    %75 = vmatprep.subr.bf16.mxu0 0
    %76 = vmatpush1.bf16.msra.mxu0 0
    %77 = vmatprep.subr.bf16.mxu0 0
    %78 = vmatpush1.bf16.msra.mxu0 0
    %79 = vmatprep.subr.bf16.mxu0 0
    %80 = vmatpush1.bf16.msra.mxu0 %v63
    %81 = vmatprep.subr.bf16.mxu0 0
    %82 = vmatpush2.bf16.msra.mxu0 0
    %83 = vmatprep.subr.bf16.mxu0 0
    %84 = vmatpush2.bf16.msra.mxu0 0
    %85 = vmatprep.subr.bf16.mxu0 0
    %86 = vmatpush2.bf16.msra.mxu0 0
    %87 = vmatprep.subr.bf16.mxu0 0
    %88 = vmatpush2.bf16.msra.mxu0 0
    %89 = vmatprep.subr.bf16.mxu0 0
    %90 = vmatpush2.bf16.msra.mxu0 0
    %91 = vmatprep.subr.bf16.mxu0 0
    %92 = vmatpush2.bf16.msra.mxu0 0
    %93 = vmatprep.subr.bf16.mxu0 0
    %94 = vmatpush2.bf16.msra.mxu0 0
    %95 = vmatprep.subr.bf16.mxu0 0
    %96 = vmatpush2.bf16.msra.mxu0 0
    %97 = vmatprep.mubr.bf16.mxu0 0
    %98 = vmatmul.mubr.bf16.gmra.mxu0 %v59
    %v99 = vpop.f32.mrf.mxu0
    %v100 = vadd.f32 %v50, %v99
    %v101 = vpop.f32.mrf.mxu0
    %v102 = vpop.f32.mrf.mxu0
    %v103 = vpop.f32.mrf.mxu0
    %104 = vdwg.mxu0
    %v105 = vpack.c.bf16 %v100, %v100
    %v106 = vld [vmem:[#allocation2] sm:$0xf]
    %v107 = vld [vmem:[#allocation2 + $0x4] sm:$0xf]
    %v108 = vld [vmem:[#allocation2 + $0x8] sm:$0xf]
    %v109 = vld [vmem:[#allocation2 + $0xc] sm:$0xf]
    %v110 = vld [vmem:[#allocation2 + $0x10] sm:$0xf]
    %v111 = vld [vmem:[#allocation2 + $0x14] sm:$0xf]
    %v112 = vld [vmem:[#allocation2 + $0x18] sm:$0xf]
    %v113 = vld [vmem:[#allocation2 + $0x1c] sm:$0xf]
    %v114 = vld [vmem:[#allocation2 + $0x20] sm:$0xf]
    %v115 = vld [vmem:[#allocation2 + $0x24] sm:$0xf]
    %v116 = vld [vmem:[#allocation2 + $0x28] sm:$0xf]
    %v117 = vld [vmem:[#allocation2 + $0x2c] sm:$0xf]
    %v118 = vld [vmem:[#allocation2 + $0x30] sm:$0xf]
    %v119 = vld [vmem:[#allocation2 + $0x34] sm:$0xf]
    %v120 = vld [vmem:[#allocation2 + $0x38] sm:$0xf]
    %v121 = vld [vmem:[#allocation2 + $0x3c] sm:$0xf]
    %v122 = vld [vmem:[%s4] sm:$0x1]
    %v124 = vlaneseq
    %v125 = vshrl.u32 %v124, 7
    %v126 = vsub.s32 0, %v125
    %v127 = vrot.slane %v122, %v126
    %v145 = vunpack.c.l.b16 %v106
    %v146 = vunpack.c.l.b16 %v107
    %v147 = vunpack.c.l.b16 %v108
    %v148 = vunpack.c.l.b16 %v109
    %v149 = vunpack.c.l.b16 %v110
    %v150 = vunpack.c.l.b16 %v111
    %v151 = vunpack.c.l.b16 %v112
    %v152 = vunpack.c.l.b16 %v113
    %v153 = vunpack.c.l.b16 %v114
    %v154 = vunpack.c.l.b16 %v115
    %v155 = vunpack.c.l.b16 %v116
    %v156 = vunpack.c.l.b16 %v117
    %v157 = vunpack.c.l.b16 %v118
    %v158 = vunpack.c.l.b16 %v119
    %v159 = vunpack.c.l.b16 %v120
    %v160 = vunpack.c.l.b16 %v121
    %v161 = vpack.c.b16 %v146, %v145
    %v162 = vpack.c.b16 %v148, %v147
    %v163 = vpack.c.b16 %v150, %v149
    %v164 = vpack.c.b16 %v152, %v151
    %v165 = vpack.c.b16 %v154, %v153
    %v166 = vpack.c.b16 %v156, %v155
    %v167 = vpack.c.b16 %v158, %v157
    %v168 = vpack.c.b16 %v160, %v159
    %177 = vmatprep.subr.bf16.mxu0 0
    %178 = vmatpush1.bf16.msra.mxu0 %v168
    %179 = vmatprep.subr.bf16.mxu0 0
    %180 = vmatpush1.bf16.msra.mxu0 %v167
    %181 = vmatprep.subr.bf16.mxu0 0
    %182 = vmatpush1.bf16.msra.mxu0 %v166
    %183 = vmatprep.subr.bf16.mxu0 0
    %184 = vmatpush1.bf16.msra.mxu0 %v165
    %185 = vmatprep.subr.bf16.mxu0 0
    %186 = vmatpush1.bf16.msra.mxu0 %v164
    %187 = vmatprep.subr.bf16.mxu0 0
    %188 = vmatpush1.bf16.msra.mxu0 %v163
    %189 = vmatprep.subr.bf16.mxu0 0
    %190 = vmatpush1.bf16.msra.mxu0 %v162
    %191 = vmatprep.subr.bf16.mxu0 0
    %192 = vmatpush1.bf16.msra.mxu0 %v161
    %193 = vmatprep.subr.bf16.mxu0 0
    %194 = vmatpush2.bf16.msra.mxu0 0
    %195 = vmatprep.subr.bf16.mxu0 0
    %196 = vmatpush2.bf16.msra.mxu0 0
    %197 = vmatprep.subr.bf16.mxu0 0
    %198 = vmatpush2.bf16.msra.mxu0 0
    %199 = vmatprep.subr.bf16.mxu0 0
    %200 = vmatpush2.bf16.msra.mxu0 0
    %201 = vmatprep.subr.bf16.mxu0 0
    %202 = vmatpush2.bf16.msra.mxu0 0
    %203 = vmatprep.subr.bf16.mxu0 0
    %204 = vmatpush2.bf16.msra.mxu0 0
    %205 = vmatprep.subr.bf16.mxu0 0
    %206 = vmatpush2.bf16.msra.mxu0 0
    %207 = vmatprep.subr.bf16.mxu0 0
    %208 = vmatpush2.bf16.msra.mxu0 0
    %209 = vmatprep.mubr.bf16.mxu0 0
    %210 = vmatmul.mubr.bf16.gmra.mxu0 %v105
    %v211 = vpop.f32.mrf.mxu0
    %v212 = vadd.f32 %v127, %v211
    %v213 = vpop.f32.mrf.mxu0
    %v214 = vpop.f32.mrf.mxu0
    %v215 = vpop.f32.mrf.mxu0
    %216 = vdwg.mxu0
    %v217 = vmax.f32 %v212, 0.0
    %v218 = vpack.c.bf16 %v217, %v217
    %s219 = scalar_lea.vmem [#allocation2], 64
    %v220 = vld [vmem:[%s219] sm:$0xf]
    %v221 = vld [vmem:[%s219 + $0x4] sm:$0xf]
    %v222 = vld [vmem:[%s219 + $0x8] sm:$0xf]
    %v223 = vld [vmem:[%s219 + $0xc] sm:$0xf]
    %v224 = vld [vmem:[%s219 + $0x10] sm:$0xf]
    %v225 = vld [vmem:[%s219 + $0x14] sm:$0xf]
    %v226 = vld [vmem:[%s219 + $0x18] sm:$0xf]
    %v227 = vld [vmem:[%s219 + $0x1c] sm:$0xf]
    %v228 = vld [vmem:[%s219 + $0x20] sm:$0xf]
    %v229 = vld [vmem:[%s219 + $0x24] sm:$0xf]
    %v230 = vld [vmem:[%s219 + $0x28] sm:$0xf]
    %v231 = vld [vmem:[%s219 + $0x2c] sm:$0xf]
    %v232 = vld [vmem:[%s219 + $0x30] sm:$0xf]
    %v233 = vld [vmem:[%s219 + $0x34] sm:$0xf]
    %v234 = vld [vmem:[%s219 + $0x38] sm:$0xf]
    %v235 = vld [vmem:[%s219 + $0x3c] sm:$0xf]
    %s236 = scalar_lea.vmem %s4, 1
    %v237 = vld [vmem:[%s236] sm:$0x1]
    %v239 = vlaneseq
    %v240 = vshrl.u32 %v239, 7
    %v241 = vsub.s32 0, %v240
    %v242 = vrot.slane %v237, %v241
    %v260 = vunpack.c.l.b16 %v220
    %v261 = vunpack.c.l.b16 %v221
    %v262 = vunpack.c.l.b16 %v222
    %v263 = vunpack.c.l.b16 %v223
    %v264 = vunpack.c.l.b16 %v224
    %v265 = vunpack.c.l.b16 %v225
    %v266 = vunpack.c.l.b16 %v226
    %v267 = vunpack.c.l.b16 %v227
    %v268 = vunpack.c.l.b16 %v228
    %v269 = vunpack.c.l.b16 %v229
    %v270 = vunpack.c.l.b16 %v230
    %v271 = vunpack.c.l.b16 %v231
    %v272 = vunpack.c.l.b16 %v232
    %v273 = vunpack.c.l.b16 %v233
    %v274 = vunpack.c.l.b16 %v234
    %v275 = vunpack.c.l.b16 %v235
    %v276 = vpack.c.b16 %v261, %v260
    %v277 = vpack.c.b16 %v263, %v262
    %v278 = vpack.c.b16 %v265, %v264
    %v279 = vpack.c.b16 %v267, %v266
    %v280 = vpack.c.b16 %v269, %v268
    %v281 = vpack.c.b16 %v271, %v270
    %v282 = vpack.c.b16 %v273, %v272
    %v283 = vpack.c.b16 %v275, %v274
    %292 = vmatprep.subr.bf16.mxu0 0
    %293 = vmatpush1.bf16.msra.mxu0 %v283
    %294 = vmatprep.subr.bf16.mxu0 0
    %295 = vmatpush1.bf16.msra.mxu0 %v282
    %296 = vmatprep.subr.bf16.mxu0 0
    %297 = vmatpush1.bf16.msra.mxu0 %v281
    %298 = vmatprep.subr.bf16.mxu0 0
    %299 = vmatpush1.bf16.msra.mxu0 %v280
    %300 = vmatprep.subr.bf16.mxu0 0
    %301 = vmatpush1.bf16.msra.mxu0 %v279
    %302 = vmatprep.subr.bf16.mxu0 0
    %303 = vmatpush1.bf16.msra.mxu0 %v278
    %304 = vmatprep.subr.bf16.mxu0 0
    %305 = vmatpush1.bf16.msra.mxu0 %v277
    %306 = vmatprep.subr.bf16.mxu0 0
    %307 = vmatpush1.bf16.msra.mxu0 %v276
    %308 = vmatprep.subr.bf16.mxu0 0
    %309 = vmatpush2.bf16.msra.mxu0 0
    %310 = vmatprep.subr.bf16.mxu0 0
    %311 = vmatpush2.bf16.msra.mxu0 0
    %312 = vmatprep.subr.bf16.mxu0 0
    %313 = vmatpush2.bf16.msra.mxu0 0
    %314 = vmatprep.subr.bf16.mxu0 0
    %315 = vmatpush2.bf16.msra.mxu0 0
    %316 = vmatprep.subr.bf16.mxu0 0
    %317 = vmatpush2.bf16.msra.mxu0 0
    %318 = vmatprep.subr.bf16.mxu0 0
    %319 = vmatpush2.bf16.msra.mxu0 0
    %320 = vmatprep.subr.bf16.mxu0 0
    %321 = vmatpush2.bf16.msra.mxu0 0
    %322 = vmatprep.subr.bf16.mxu0 0
    %323 = vmatpush2.bf16.msra.mxu0 0
    %324 = vmatprep.mubr.bf16.mxu0 0
    %325 = vmatmul.mubr.bf16.gmra.mxu0 %v218
    %v326 = vpop.f32.mrf.mxu0
    %v327 = vadd.f32 %v242, %v326
    %v328 = vpop.f32.mrf.mxu0
    %v329 = vpop.f32.mrf.mxu0
    %v330 = vpop.f32.mrf.mxu0
    %331 = vdwg.mxu0
    %v332 = vmax.f32 %v327, 0.0
    %v333 = vpack.c.bf16 %v332, %v332
    %s334 = scalar_lea.vmem [#allocation2], 128
    %v335 = vld [vmem:[%s334] sm:$0xf]
    %v336 = vld [vmem:[%s334 + $0x4] sm:$0xf]
    %v337 = vld [vmem:[%s334 + $0x8] sm:$0xf]
    %v338 = vld [vmem:[%s334 + $0xc] sm:$0xf]
    %v339 = vld [vmem:[%s334 + $0x10] sm:$0xf]
    %v340 = vld [vmem:[%s334 + $0x14] sm:$0xf]
    %v341 = vld [vmem:[%s334 + $0x18] sm:$0xf]
    %v342 = vld [vmem:[%s334 + $0x1c] sm:$0xf]
    %v343 = vld [vmem:[%s334 + $0x20] sm:$0xf]
    %v344 = vld [vmem:[%s334 + $0x24] sm:$0xf]
    %v345 = vld [vmem:[%s334 + $0x28] sm:$0xf]
    %v346 = vld [vmem:[%s334 + $0x2c] sm:$0xf]
    %v347 = vld [vmem:[%s334 + $0x30] sm:$0xf]
    %v348 = vld [vmem:[%s334 + $0x34] sm:$0xf]
    %v349 = vld [vmem:[%s334 + $0x38] sm:$0xf]
    %v350 = vld [vmem:[%s334 + $0x3c] sm:$0xf]
    %s351 = scalar_lea.vmem %s4, 2
    %v352 = vld [vmem:[%s351] sm:$0x1]
    %v354 = vlaneseq
    %v355 = vshrl.u32 %v354, 7
    %v356 = vsub.s32 0, %v355
    %v357 = vrot.slane %v352, %v356
    %v375 = vunpack.c.l.b16 %v335
    %v376 = vunpack.c.l.b16 %v336
    %v377 = vunpack.c.l.b16 %v337
    %v378 = vunpack.c.l.b16 %v338
    %v379 = vunpack.c.l.b16 %v339
    %v380 = vunpack.c.l.b16 %v340
    %v381 = vunpack.c.l.b16 %v341
    %v382 = vunpack.c.l.b16 %v342
    %v383 = vunpack.c.l.b16 %v343
    %v384 = vunpack.c.l.b16 %v344
    %v385 = vunpack.c.l.b16 %v345
    %v386 = vunpack.c.l.b16 %v346
    %v387 = vunpack.c.l.b16 %v347
    %v388 = vunpack.c.l.b16 %v348
    %v389 = vunpack.c.l.b16 %v349
    %v390 = vunpack.c.l.b16 %v350
    %v391 = vpack.c.b16 %v376, %v375
    %v392 = vpack.c.b16 %v378, %v377
    %v393 = vpack.c.b16 %v380, %v379
    %v394 = vpack.c.b16 %v382, %v381
    %v395 = vpack.c.b16 %v384, %v383
    %v396 = vpack.c.b16 %v386, %v385
    %v397 = vpack.c.b16 %v388, %v387
    %v398 = vpack.c.b16 %v390, %v389
    %407 = vmatprep.subr.bf16.mxu0 0
    %408 = vmatpush1.bf16.msra.mxu0 %v398
    %409 = vmatprep.subr.bf16.mxu0 0
    %410 = vmatpush1.bf16.msra.mxu0 %v397
    %411 = vmatprep.subr.bf16.mxu0 0
    %412 = vmatpush1.bf16.msra.mxu0 %v396
    %413 = vmatprep.subr.bf16.mxu0 0
    %414 = vmatpush1.bf16.msra.mxu0 %v395
    %415 = vmatprep.subr.bf16.mxu0 0
    %416 = vmatpush1.bf16.msra.mxu0 %v394
    %417 = vmatprep.subr.bf16.mxu0 0
    %418 = vmatpush1.bf16.msra.mxu0 %v393
    %419 = vmatprep.subr.bf16.mxu0 0
    %420 = vmatpush1.bf16.msra.mxu0 %v392
    %421 = vmatprep.subr.bf16.mxu0 0
    %422 = vmatpush1.bf16.msra.mxu0 %v391
    %423 = vmatprep.subr.bf16.mxu0 0
    %424 = vmatpush2.bf16.msra.mxu0 0
    %425 = vmatprep.subr.bf16.mxu0 0
    %426 = vmatpush2.bf16.msra.mxu0 0
    %427 = vmatprep.subr.bf16.mxu0 0
    %428 = vmatpush2.bf16.msra.mxu0 0
    %429 = vmatprep.subr.bf16.mxu0 0
    %430 = vmatpush2.bf16.msra.mxu0 0
    %431 = vmatprep.subr.bf16.mxu0 0
    %432 = vmatpush2.bf16.msra.mxu0 0
    %433 = vmatprep.subr.bf16.mxu0 0
    %434 = vmatpush2.bf16.msra.mxu0 0
    %435 = vmatprep.subr.bf16.mxu0 0
    %436 = vmatpush2.bf16.msra.mxu0 0
    %437 = vmatprep.subr.bf16.mxu0 0
    %438 = vmatpush2.bf16.msra.mxu0 0
    %439 = vmatprep.mubr.bf16.mxu0 0
    %440 = vmatmul.mubr.bf16.gmra.mxu0 %v333
    %v441 = vpop.f32.mrf.mxu0
    %v442 = vadd.f32 %v357, %v441
    %v443 = vpop.f32.mrf.mxu0
    %v444 = vpop.f32.mrf.mxu0
    %v445 = vpop.f32.mrf.mxu0
    %446 = vdwg.mxu0
    %v447 = vmax.f32 %v442, 0.0
    %v448 = vpack.c.bf16 %v447, %v447
    %v449 = vld [vmem:[%s5] sm:$0xf]
    %v450 = vld [vmem:[%s5 + $0x4] sm:$0xf]
    %v451 = vld [vmem:[%s5 + $0x8] sm:$0xf]
    %v452 = vld [vmem:[%s5 + $0xc] sm:$0xf]
    %v453 = vld [vmem:[%s5 + $0x10] sm:$0xf]
    %v454 = vld [vmem:[%s5 + $0x14] sm:$0xf]
    %v455 = vld [vmem:[%s5 + $0x18] sm:$0xf]
    %v456 = vld [vmem:[%s5 + $0x1c] sm:$0xf]
    %v457 = vld [vmem:[%s5 + $0x20] sm:$0xf]
    %v458 = vld [vmem:[%s5 + $0x24] sm:$0xf]
    %v459 = vld [vmem:[%s5 + $0x28] sm:$0xf]
    %v460 = vld [vmem:[%s5 + $0x2c] sm:$0xf]
    %v461 = vld [vmem:[%s5 + $0x30] sm:$0xf]
    %v462 = vld [vmem:[%s5 + $0x34] sm:$0xf]
    %v463 = vld [vmem:[%s5 + $0x38] sm:$0xf]
    %v464 = vld [vmem:[%s5 + $0x3c] sm:$0xf]
    %v465 = vld [vmem:[%s6] sm:$0x1]
    %v467 = vlaneseq
    %v468 = vshrl.u32 %v467, 7
    %v469 = vsub.s32 0, %v468
    %v470 = vrot.slane %v465, %v469
    %v488 = vunpack.c.l.b16 %v449
    %v489 = vunpack.c.l.b16 %v450
    %v490 = vunpack.c.l.b16 %v451
    %v491 = vunpack.c.l.b16 %v452
    %v492 = vunpack.c.l.b16 %v453
    %v493 = vunpack.c.l.b16 %v454
    %v494 = vunpack.c.l.b16 %v455
    %v495 = vunpack.c.l.b16 %v456
    %v496 = vunpack.c.l.b16 %v457
    %v497 = vunpack.c.l.b16 %v458
    %v498 = vunpack.c.l.b16 %v459
    %v499 = vunpack.c.l.b16 %v460
    %v500 = vunpack.c.l.b16 %v461
    %v501 = vunpack.c.l.b16 %v462
    %v502 = vunpack.c.l.b16 %v463
    %v503 = vunpack.c.l.b16 %v464
    %v504 = vpack.c.b16 %v489, %v488
    %v505 = vpack.c.b16 %v491, %v490
    %v506 = vpack.c.b16 %v493, %v492
    %v507 = vpack.c.b16 %v495, %v494
    %v508 = vpack.c.b16 %v497, %v496
    %v509 = vpack.c.b16 %v499, %v498
    %v510 = vpack.c.b16 %v501, %v500
    %v511 = vpack.c.b16 %v503, %v502
    %520 = vmatprep.subr.bf16.mxu0 0
    %521 = vmatpush1.bf16.msra.mxu0 %v511
    %522 = vmatprep.subr.bf16.mxu0 0
    %523 = vmatpush1.bf16.msra.mxu0 %v510
    %524 = vmatprep.subr.bf16.mxu0 0
    %525 = vmatpush1.bf16.msra.mxu0 %v509
    %526 = vmatprep.subr.bf16.mxu0 0
    %527 = vmatpush1.bf16.msra.mxu0 %v508
    %528 = vmatprep.subr.bf16.mxu0 0
    %529 = vmatpush1.bf16.msra.mxu0 %v507
    %530 = vmatprep.subr.bf16.mxu0 0
    %531 = vmatpush1.bf16.msra.mxu0 %v506
    %532 = vmatprep.subr.bf16.mxu0 0
    %533 = vmatpush1.bf16.msra.mxu0 %v505
    %534 = vmatprep.subr.bf16.mxu0 0
    %535 = vmatpush1.bf16.msra.mxu0 %v504
    %536 = vmatprep.subr.bf16.mxu0 0
    %537 = vmatpush2.bf16.msra.mxu0 0
    %538 = vmatprep.subr.bf16.mxu0 0
    %539 = vmatpush2.bf16.msra.mxu0 0
    %540 = vmatprep.subr.bf16.mxu0 0
    %541 = vmatpush2.bf16.msra.mxu0 0
    %542 = vmatprep.subr.bf16.mxu0 0
    %543 = vmatpush2.bf16.msra.mxu0 0
    %544 = vmatprep.subr.bf16.mxu0 0
    %545 = vmatpush2.bf16.msra.mxu0 0
    %546 = vmatprep.subr.bf16.mxu0 0
    %547 = vmatpush2.bf16.msra.mxu0 0
    %548 = vmatprep.subr.bf16.mxu0 0
    %549 = vmatpush2.bf16.msra.mxu0 0
    %550 = vmatprep.subr.bf16.mxu0 0
    %551 = vmatpush2.bf16.msra.mxu0 0
    %552 = vmatprep.mubr.bf16.mxu0 0
    %553 = vmatmul.mubr.bf16.gmra.mxu0 %v448
    %v554 = vpop.f32.mrf.mxu0
    %v555 = vadd.f32 %v470, %v554
    %v556 = vpop.f32.mrf.mxu0
    %v557 = vpop.f32.mrf.mxu0
    %v558 = vpop.f32.mrf.mxu0
    %559 = vdwg.mxu0
    %560 = vst [vmem:[%s7] sm:$0xff] %v555
    // Predicated region
    $region34: #{boosting_time_emb_forward.1} parent=1 // pred_check
      _
    $region35: #{boosting_time_emb_forward.1} parent=1 // pred_check_branch
      %562 = sbr.rel (0) target = $region37
    $region36: #{boosting_time_emb_forward.1} parent=1 // pred_region
      _
    $region37: #{boosting_time_emb_forward.1} parent=1 // pred_fallthru
      _
    // Predicated region
    $region38: #{boosting_time_emb_forward.1} parent=1 // pred_check
      _
    $region39: #{boosting_time_emb_forward.1} parent=1 // pred_check_branch
      %564 = sbr.rel (0) target = $region41
    $region40: #{boosting_time_emb_forward.1} parent=1 // pred_region
      _
    $region41: #{boosting_time_emb_forward.1} parent=1 // pred_fallthru
      _
    %565 = vsyncpa [#allocation3], 1

</llo_original>
